<compile_context>
chip_gen: v7x
topology: tpu7x:2x2x1
jax: 0.10.0
libtpu: 0.0.40
codegen_flags: <defaults>
</compile_context>

<pallas_src>
import math
import functools

import numpy as np
import jax
import jax.numpy as jnp
from jax import lax
from jax.experimental import pallas as pl
from jax.experimental.pallas import tpu as pltpu


def gaussian_kernel_2d(kernel_size: int, sigma: float) -> np.ndarray:
    """Normalized 2-D Gaussian, matches torch init_weights(..., dim=2). float64."""
    x = np.arange(kernel_size, dtype=np.float64)
    xg = np.tile(x, kernel_size).reshape(kernel_size, kernel_size)
    yg = xg.T
    mean = (kernel_size - 1) / 2.0
    var = float(sigma) ** 2
    g = (1.0 / (2.0 * math.pi * var * var)) * np.exp(
        -((xg - mean) ** 2 + (yg - mean) ** 2) / (2.0 * var))
    return g / g.sum()                                           # (K, K)


def _conv_matrix(n_in: int, n_out: int, K: int, stride: int, taps: np.ndarray) -> np.ndarray:
    """Dense operator: out[i] = sum_k taps[k] * in[i*stride + k]  (valid conv)."""
    M = np.zeros((n_out, n_in), dtype=np.float64)
    for i in range(n_out):
        M[i, i * stride:i * stride + K] = taps
    return M


def _gauss_down_kernel(a_ref, bt_ref, x_ref, o_ref, *, BP, H, W, Ho, Wo):
    # a_ref : VMEM (Ho, H)    row-blur + row-stride operator
    # bt_ref: VMEM (W, Wo)    col-blur + col-stride operator (pre-transposed)
    # x_ref : VMEM (BP, H, W) batch of input planes
    # o_ref : VMEM (BP, Ho, Wo)
    x = x_ref[...].astype(jnp.float32)                           # (BP, H, W)
    bt = bt_ref[...]                                             # (W, Wo)
    a = a_ref[...]                                               # (Ho, H)

    # Column pass (blur + stride along W).  When H is a multiple of 8, the
    # (BP, H, W) -> (BP*H, W) reshape is layout-free, so the MXU sees one real
    # (BP*H, W) @ (W, Wo) operand instead of BP small fragments.
    if H % 8 == 0:
        t = jnp.dot(x.reshape(BP * H, W), bt,
                    preferred_element_type=jnp.float32).reshape(BP, H, Wo)
    else:
        t = lax.dot_general(x, jnp.broadcast_to(bt, (BP, W, Wo)),
                            dimension_numbers=(((2,), (1,)), ((0,), (0,))),
                            preferred_element_type=jnp.float32)  # (BP, H, Wo)

    # Row pass (blur + stride along H): batched (Ho, H) @ (H, Wo) per plane.
    out = lax.dot_general(jnp.broadcast_to(a, (BP, Ho, H)), t,
                          dimension_numbers=(((2,), (1,)), ((0,), (0,))),
                          preferred_element_type=jnp.float32)    # (BP, Ho, Wo)
    o_ref[...] = out.astype(o_ref.dtype)


def gaussian_layer_forward(x, gaussian_kernel_size, gaussian_std, stride=2,
                           batch_block=8):
    """Pallas equivalent of gaussian_layer(K, sigma, stride).forward(x), NCHW."""
    N, C, H, W = x.shape
    assert C == 1, "gaussian_layer uses Conv2d(1, 1, ...): channel dim must be 1"
    K = gaussian_kernel_size
    Ho = (H - K) // stride + 1
    Wo = (W - K) // stride + 1

    # Exact separable factorization of the normalized 2-D Gaussian:
    # taps = row-sum of the normalized kernel, and taps (x) taps == kernel.
    g2d = gaussian_kernel_2d(K, gaussian_std)                    # (K, K) float64
    taps = g2d.sum(axis=1)                                       # (K,)   float64
    A = jnp.asarray(_conv_matrix(H, Ho, K, stride, taps).astype(np.float32))      # (Ho, H)
    Bt = jnp.asarray(np.ascontiguousarray(
        _conv_matrix(W, Wo, K, stride, taps).T).astype(np.float32))               # (W, Wo)

    NC = N * C
    itemsize = jnp.dtype(x.dtype).itemsize
    # Per-plane VMEM footprint: double-buffered in/out tiles + f32 temporaries.
    per_plane = (2 * H * W + 2 * Ho * Wo) * itemsize + (H * W + H * Wo + Ho * Wo) * 4
    cap = max(1, (24 * 1024 * 1024) // per_plane)
    bp_max = max(1, min(batch_block, NC, cap))
    # Largest divisor of NC that fits the budget -> no HBM padding copy ever.
    BP = 1
    for cand in range(bp_max, 0, -1):
        if NC % cand == 0:
            BP = cand
            break
    n_blocks = NC // BP

    xf = x.reshape(NC, H, W)                                     # metadata-only reshape

    kernel = functools.partial(_gauss_down_kernel, BP=BP, H=H, W=W, Ho=Ho, Wo=Wo)

    cost = pl.CostEstimate(
        flops=2 * NC * (H * W * Wo + Ho * H * Wo),
        transcendentals=0,
        bytes_accessed=NC * (H * W + Ho * Wo) * itemsize + (Ho * H + W * Wo) * 4,
    )

    out = pl.pallas_call(
        kernel,
        out_shape=jax.ShapeDtypeStruct((NC, Ho, Wo), x.dtype),
        grid=(n_blocks,),
        in_specs=[
            pl.BlockSpec((Ho, H), lambda b: (0, 0)),             # resident across steps
            pl.BlockSpec((W, Wo), lambda b: (0, 0)),             # resident across steps
            pl.BlockSpec((BP, H, W), lambda b: (b, 0, 0)),
        ],
        out_specs=pl.BlockSpec((BP, Ho, Wo), lambda b: (b, 0, 0)),
        compiler_params=pltpu.CompilerParams(dimension_semantics=("parallel",)),
        cost_estimate=cost,
    )(A, Bt, xf)

    return out.reshape(N, C, Ho, Wo)


if __name__ == "__main__":
    # Small, module-consistent shapes: C must be 1 (Conv2d(1,1,...)).
    # N=6 with batch_block=4 -> BP=3, two grid steps (exercises plane batching
    # and the multi-step parallel grid) with no host-side padding copy.
    K, SIGMA, STRIDE = 5, 1.0, 2
    key = jax.random.PRNGKey(0)
    x = jax.random.normal(key, (6, 1, 16, 16), dtype=jnp.float32)

    y = gaussian_layer_forward(x, gaussian_kernel_size=K, gaussian_std=SIGMA,
                               stride=STRIDE, batch_block=4)
    y = jax.block_until_ready(y)

    # Pure-JAX reference: valid conv, stride 2, NCHW, same Gaussian weights.
    w = jnp.asarray(gaussian_kernel_2d(K, SIGMA).astype(np.float32)).reshape(1, 1, K, K)
    y_ref = lax.conv_general_dilated(
        x, w, window_strides=(STRIDE, STRIDE), padding="VALID",
        dimension_numbers=("NCHW", "OIHW", "NCHW"))

    assert y.shape == (6, 1, 6, 6), y.shape
    np.testing.assert_allclose(np.asarray(y), np.asarray(y_ref), rtol=1e-5, atol=1e-5)

    print("KERNEL_OK")
</pallas_src>

<mosaic_0001>
module attributes {stable_mosaic.version = 11 : i64} {
  func.func @_gauss_down_kernel(%arg0: i32, %arg1: memref<6x16xf32, #tpu.memory_space<vmem>>, %arg2: memref<16x6xf32, #tpu.memory_space<vmem>>, %arg3: memref<3x16x16xf32, #tpu.memory_space<vmem>>, %arg4: memref<3x6x6xf32, #tpu.memory_space<vmem>>) attributes {dimension_semantics = [#tpu.dimension_semantics<parallel>], iteration_bounds = array<i64: 2>, scalar_prefetch = 0 : i64, scratch_operands = 0 : i64, tpu.core_type = #tpu.core_type<tc>, window_params = [{pipeline_mode = #tpu.pipeline_mode<synchronous>, transform_indices = @transform_0, window_bounds = array<i64: 6, 16>}, {pipeline_mode = #tpu.pipeline_mode<synchronous>, transform_indices = @transform_1, window_bounds = array<i64: 16, 6>}, {transform_indices = @transform_2, window_bounds = array<i64: 3, 16, 16>}, {transform_indices = @transform_3, window_bounds = array<i64: 3, 6, 6>}]} {
    %c0 = arith.constant 0 : index
    %c0_0 = arith.constant 0 : index
    %c0_1 = arith.constant 0 : index
    %0 = vector.load %arg3[%c0, %c0_0, %c0_1] : memref<3x16x16xf32, #tpu.memory_space<vmem>>, vector<3x16x16xf32>
    %c0_2 = arith.constant 0 : index
    %c0_3 = arith.constant 0 : index
    %1 = vector.load %arg2[%c0_2, %c0_3] : memref<16x6xf32, #tpu.memory_space<vmem>>, vector<16x6xf32>
    %c0_4 = arith.constant 0 : index
    %c0_5 = arith.constant 0 : index
    %2 = vector.load %arg1[%c0_4, %c0_5] : memref<6x16xf32, #tpu.memory_space<vmem>>, vector<6x16xf32>
    %3 = vector.shape_cast %0 : vector<3x16x16xf32> to vector<48x16xf32>
    %cst = arith.constant dense<0.000000e+00> : vector<48x6xf32>
    %4 = tpu.matmul %3, %1, %cst {dimension_numbers = #tpu.dot_dimension_numbers<[1], [0], [0], [1], [0, 0, 1, 1], [], []>} : vector<48x16xf32>, vector<16x6xf32>, vector<48x6xf32> -> vector<48x6xf32>
    %5 = vector.shape_cast %4 : vector<48x6xf32> to vector<3x16x6xf32>
    %6 = vector.shape_cast %2 : vector<6x16xf32> to vector<1x6x16xf32>
    %7 = vector.broadcast %6 : vector<1x6x16xf32> to vector<3x6x16xf32>
    %cst_6 = arith.constant dense<0.000000e+00> : vector<3x6x6xf32>
    %8 = tpu.matmul %7, %5, %cst_6 {dimension_numbers = #tpu.dot_dimension_numbers<[2], [1], [1], [2], [0, 0, 0, 1, 1, 2], [0], [0]>} : vector<3x6x16xf32>, vector<3x16x6xf32>, vector<3x6x6xf32> -> vector<3x6x6xf32>
    %c0_7 = arith.constant 0 : index
    %c0_8 = arith.constant 0 : index
    %c0_9 = arith.constant 0 : index
    %9 = vector.load %arg4[%c0_7, %c0_8, %c0_9] : memref<3x6x6xf32, #tpu.memory_space<vmem>>, vector<3x6x6xf32>
    tpu.vector_store %arg4[%c0_7, %c0_8, %c0_9], %8 {strides = array<i32>} : memref<3x6x6xf32, #tpu.memory_space<vmem>>, vector<3x6x6xf32>,
    return
  }
  func.func @transform_0(%arg0: i32) -> (i32, i32) {
    %c0_i32 = arith.constant 0 : i32
    %c0_i32_0 = arith.constant 0 : i32
    %c0_i32_1 = arith.constant 0 : i32
    return %c0_i32, %c0_i32_0 : i32, i32
  }
  func.func @transform_1(%arg0: i32) -> (i32, i32) {
    %c0_i32 = arith.constant 0 : i32
    %c0_i32_0 = arith.constant 0 : i32
    %c0_i32_1 = arith.constant 0 : i32
    return %c0_i32, %c0_i32_0 : i32, i32
  }
  func.func @transform_2(%arg0: i32) -> (i32, i32, i32) {
    %c0_i32 = arith.constant 0 : i32
    %c0_i32_0 = arith.constant 0 : i32
    %c0_i32_1 = arith.constant 0 : i32
    return %arg0, %c0_i32, %c0_i32_0 : i32, i32, i32
  }
  func.func @transform_3(%arg0: i32) -> (i32, i32, i32) {
    %c0_i32 = arith.constant 0 : i32
    %c0_i32_0 = arith.constant 0 : i32
    %c0_i32_1 = arith.constant 0 : i32
    return %arg0, %c0_i32, %c0_i32_0 : i32, i32, i32
  }
}

</mosaic_0001>

<llo_original>
// kernel: tpu_custom_call.1
$region0: #{tpu_custom_call.1}
  #allocation0 [shape = 'u32[]', space=smem, size = 0x4, offset = 0x4, fixed_abs, tag = 'smem constant byte address 0x4 - core index']
  #allocation1 [shape = 'u32[144,128]{1,0:T(1,128)}', space=vmem, size = 0x12000, scoped, tag = 'internal scratch']
  %s0 = inlined_call_operand.vmem [shape: f32[6,16], index: 0, kind: input, shape index: {}]
  %s1 = inlined_call_operand.vmem [shape: f32[16,6], index: 1, kind: input, shape index: {}]
  %s2 = inlined_call_operand.hbm [shape: f32[6,16,16], index: 2, kind: input, shape index: {}]
  %s3 = inlined_call_operand.hbm [shape: f32[6,6,6], index: 3, kind: output, shape index: {}]
  %s4 = sld [smem:[#allocation0]]
  $region49: #{tpu_custom_call.1} parent=0
    _
  %s6 = ssub.s32 1, %s4
  %s7 = scalar_select 0, %s6, %s4
  $region1: #{tpu_custom_call.1} parent=0
    #allocation2 [shape = 'u8[49152]{0}', space=vmem, size = 0xc000, scoped, tag = 'input window, operand 2']
    #allocation3 [shape = 's32[2]{0}', space=sflag, size = 0x8, scoped, tag = 'scoped memory for tpu_custom_call.1']
    #allocation4 [shape = 's32[2]{0}', space=sflag, size = 0x8, scoped, tag = 'scoped memory for tpu_custom_call.1']
    #allocation5 [shape = 'u8[24576]{0}', space=vmem, size = 0x6000, scoped, tag = 'output window, operand 0']
    %8 = vsyncpa [#allocation3], 0
    %s9 = scalar_lea.sflag [#allocation3], 1
    %10 = vsyncpa %s9, 0
    %11 = vsyncpa [#allocation4], 0
    %s12 = scalar_lea.sflag [#allocation4], 1
    %13 = vsyncpa %s12, 0
    loop: start=0, step=1, limit=4
    $region2: #{tpu_custom_call.1} parent=1 // loop_pre_header
      _
    $region3: #{tpu_custom_call.1} parent=1 // loop_header
      %s15 = sphi 0, %s19
      %p16 = scmp.ge.s32.totalorder %s15, 4
      %s23 = sphi 0, %s23
      %s25 = sphi 0, %s23
      %s26 = sphi 0, %s25
      %s40 = sphi 0, %s26
      %s44 = sphi 0, %s44
      %s46 = sphi 0, %s44
      %s47 = sphi 0, %s46
      %s61 = sphi 0, %s47
      %s67 = sphi 0, %s69
      %s70 = sphi 0, %s67
      %s71 = sphi 0, %s70
      %s87 = sphi 0, %s71
      %s93 = sphi 0, %s95
      %s96 = sphi 0, %s93
      %s97 = sphi 0, %s96
      %s113 = sphi 0, %s97
    $region4: #{tpu_custom_call.1} parent=1 // loop_header_branch
      %18 = sbr.rel (%p16) target = $region8
    $region5: #{tpu_custom_call.1} parent=1 // loop_body
      %s20 = ssub.s32 %s15, 1
      %s21 = ssub.s32 %s15, 2
      %s22 = sadd.s32 %s15, 1
      %s24 = sadd.s32 %s23, 1
      %p27 = scmp.eq.s32.totalorder %s15, 1
      %p28 = scmp.ne.s32.totalorder %s23, %s25
      %p29 = scmp.eq.s32.totalorder %s15, 0
      %p30 = por %p28, %p29
      %p31 = scmp.ne.s32.totalorder %s23, %s25
      %p32 = scmp.eq.s32.totalorder %s20, 1
      %p33 = por %p31, %p32
      %p34 = scmp.ne.s32.totalorder %s25, %s26
      %p35 = scmp.eq.s32.totalorder %s20, 0
      %p36 = por %p34, %p35
      %p37 = scmp.ne.s32.totalorder %s25, %s26
      %p38 = scmp.eq.s32.totalorder %s21, 1
      %p39 = por %p37, %p38
      %p41 = scmp.ne.s32.totalorder %s26, %s40
      %p42 = scmp.eq.s32.totalorder %s21, 0
      %p43 = por %p41, %p42
      %s45 = sadd.s32 %s44, 1
      %p48 = scmp.eq.s32.totalorder %s15, 1
      %p49 = scmp.ne.s32.totalorder %s44, %s46
      %p50 = scmp.eq.s32.totalorder %s15, 0
      %p51 = por %p49, %p50
      %p52 = scmp.ne.s32.totalorder %s44, %s46
      %p53 = scmp.eq.s32.totalorder %s20, 1
      %p54 = por %p52, %p53
      %p55 = scmp.ne.s32.totalorder %s46, %s47
      %p56 = scmp.eq.s32.totalorder %s20, 0
      %p57 = por %p55, %p56
      %p58 = scmp.ne.s32.totalorder %s46, %s47
      %p59 = scmp.eq.s32.totalorder %s21, 1
      %p60 = por %p58, %p59
      %p62 = scmp.ne.s32.totalorder %s47, %s61
      %p63 = scmp.eq.s32.totalorder %s21, 0
      %p64 = por %p62, %p63
      %s65 = ssub.s32 %s15, %s22
      %p66 = scmp.eq.s32.totalorder %s65, 0
      %s68 = sadd.s32 %s67, 1
      %s69 = scalar_select %p66, %s67, %s68
      %p72 = pneg %p66
      %p73 = scmp.eq.s32.totalorder %s15, 1
      %p74 = por %p72, %p73
      %p75 = scmp.ne.s32.totalorder %s67, %s70
      %p76 = scmp.eq.s32.totalorder %s15, 0
      %p77 = por %p75, %p76
      %p78 = scmp.ne.s32.totalorder %s67, %s70
      %p79 = scmp.eq.s32.totalorder %s20, 1
      %p80 = por %p78, %p79
      %p81 = scmp.ne.s32.totalorder %s70, %s71
      %p82 = scmp.eq.s32.totalorder %s20, 0
      %p83 = por %p81, %p82
      %p84 = scmp.ne.s32.totalorder %s70, %s71
      %p85 = scmp.eq.s32.totalorder %s21, 1
      %p86 = por %p84, %p85
      %p88 = scmp.ne.s32.totalorder %s71, %s87
      %p89 = scmp.eq.s32.totalorder %s21, 0
      %p90 = por %p88, %p89
      %s91 = ssub.s32 %s15, %s22
      %p92 = scmp.eq.s32.totalorder %s91, 0
      %s94 = sadd.s32 %s93, 1
      %s95 = scalar_select %p92, %s93, %s94
      %p98 = pneg %p92
      %p99 = scmp.eq.s32.totalorder %s15, 1
      %p100 = por %p98, %p99
      %p101 = scmp.ne.s32.totalorder %s93, %s96
      %p102 = scmp.eq.s32.totalorder %s15, 0
      %p103 = por %p101, %p102
      %p104 = scmp.ne.s32.totalorder %s93, %s96
      %p105 = scmp.eq.s32.totalorder %s20, 1
      %p106 = por %p104, %p105
      %p107 = scmp.ne.s32.totalorder %s96, %s97
      %p108 = scmp.eq.s32.totalorder %s20, 0
      %p109 = por %p107, %p108
      %p110 = scmp.ne.s32.totalorder %s96, %s97
      %p111 = scmp.eq.s32.totalorder %s21, 1
      %p112 = por %p110, %p111
      %p114 = scmp.ne.s32.totalorder %s97, %s113
      %p115 = scmp.eq.s32.totalorder %s21, 0
      %p116 = por %p114, %p115
      %p117 = scmp.le.s32.totalorder 1, %s15
      %p118 = scmp.lt.s32.totalorder %s15, 3
      %p119 = pnand %p117, %p118
      %p120 = pneg %p119
      // Predicated region
      $region9: #{tpu_custom_call.1} parent=5 // pred_check
        _
      $region10: #{tpu_custom_call.1} parent=5 // pred_check_branch
        %122 = sbr.rel (%p119) target = $region12
      $region11: #{tpu_custom_call.1} parent=5 // pred_region
        %s123 = ssub.s32 %s15, 1
        // Predicated region
        $region13: #{tpu_custom_call.1} parent=11 // pred_check
          %p124 = pneg %p36
        $region14: #{tpu_custom_call.1} parent=11 // pred_check_branch
          %126 = sbr.rel (%p124) target = $region16
        $region15: #{tpu_custom_call.1} parent=11 // pred_region
          _
        $region16: #{tpu_custom_call.1} parent=11 // pred_fallthru
          _
        // Predicated region
        $region17: #{tpu_custom_call.1} parent=11 // pred_check
          %p127 = pneg %p57
        $region18: #{tpu_custom_call.1} parent=11 // pred_check_branch
          %129 = sbr.rel (%p127) target = $region20
        $region19: #{tpu_custom_call.1} parent=11 // pred_region
          _
        $region20: #{tpu_custom_call.1} parent=11 // pred_fallthru
          _
      $region12: #{tpu_custom_call.1} parent=5 // pred_fallthru
        _
      %p130 = scmp.lt.s32.totalorder %s15, 2
      // Predicated region
      $region21: #{tpu_custom_call.1} parent=5 // pred_check
        %p131 = pneg %p130
      $region22: #{tpu_custom_call.1} parent=5 // pred_check_branch
        %133 = sbr.rel (%p131) target = $region24
      $region23: #{tpu_custom_call.1} parent=5 // pred_region
        // Predicated region
        $region25: #{tpu_custom_call.1} parent=23 // pred_check
          %p134 = pneg %p77
        $region26: #{tpu_custom_call.1} parent=23 // pred_check_branch
          %136 = sbr.rel (%p134) target = $region28
        $region27: #{tpu_custom_call.1} parent=23 // pred_region
          %s137 = sand.u32 %s67, 1
          %s138 = scalar_lea.sflag [#allocation3], %s137
          %s139 = sand.u32 %s67, 1
          %s140 = smul.addr %s139, 48
          %s141 = scalar_lea.vmem [#allocation2], %s140
          %s142 = smul.u32 3, %s15
          %s144 = ssub.s32 768, 768
          %145 = vsyncadd %s138, %s144
          %s146 = smul.addr %s142, 2
          %s147 = smul.addr %s146, 128
          %s148 = scalar_lea.hbm %s2, %s147
          %s149 = sshll.u32 %s141, 4
          %s150 = int_to_ptr.vmem [resolvable:$true] %s149
          %155 = dma.hbm_to_vmem [thread:$0]  %s148, 768, %s150, %s138, 128, 128, 8
        $region28: #{tpu_custom_call.1} parent=23 // pred_fallthru
          _
      $region24: #{tpu_custom_call.1} parent=5 // pred_fallthru
        _
      %p156 = scmp.le.s32.totalorder 1, %s15
      %p157 = scmp.lt.s32.totalorder %s15, 3
      %p158 = pnand %p156, %p157
      %p159 = pneg %p158
      // Predicated region
      $region29: #{tpu_custom_call.1} parent=5 // pred_check
        _
      $region30: #{tpu_custom_call.1} parent=5 // pred_check_branch
        %161 = sbr.rel (%p158) target = $region32
      $region31: #{tpu_custom_call.1} parent=5 // pred_region
        %s162 = ssub.s32 %s15, 1
        %s163 = sand.u32 %s70, 1
        %s164 = scalar_lea.sflag [#allocation3], %s163
        %s165 = sand.u32 %s70, 1
        %s166 = smul.addr %s165, 48
        %s167 = scalar_lea.vmem [#allocation2], %s166
        // Predicated region
        $region33: #{tpu_custom_call.1} parent=31 // pred_check
          %p168 = pneg %p83
        $region34: #{tpu_custom_call.1} parent=31 // pred_check_branch
          %170 = sbr.rel (%p168) target = $region36
        $region35: #{tpu_custom_call.1} parent=31 // pred_region
          %171 = dma.done %s164, 768
        $region36: #{tpu_custom_call.1} parent=31 // pred_fallthru
          _
        %p172 = pneg %p36
        %p173 = pneg %p33
        %p174 = pneg %p57
        %p175 = pneg %p54
        %s176 = sand.u32 %s70, 1
        %s177 = scalar_lea.sflag [#allocation3], %s176
        %s178 = sand.u32 %s70, 1
        %s179 = smul.addr %s178, 48
        %s180 = scalar_lea.vmem [#allocation2], %s179
        %p181 = pneg %p83
        %p182 = pneg %p80
        %p183 = pneg %p109
        %p184 = pneg %p106
        %s185 = sand.u32 %s96, 1
        %s186 = scalar_lea.sflag [#allocation4], %s185
        %s187 = sand.u32 %s96, 1
        %s188 = smul.addr %s187, 24
        %s189 = scalar_lea.vmem [#allocation5], %s188
        %s190 = smul.u32 3, %s20
        %s191 = smul.u32 3, %s20
        %v192 = vld [vmem:[%s167] sm:$0xff]
        %v193 = vld [vmem:[%s167 + $0x8] sm:$0xff]
        %v194 = vld [vmem:[%s167 + $0x10] sm:$0xff]
        %v195 = vld [vmem:[%s167 + $0x18] sm:$0xff]
        %v196 = vld [vmem:[%s167 + $0x20] sm:$0xff]
        %v197 = vld [vmem:[%s167 + $0x28] sm:$0xff]
        %v198 = vld [vmem:[%s1] sm:$0xff]
        %v199 = vld [vmem:[%s1 + $0x8] sm:$0xff]
        %v200 = vld [vmem:[%s0] sm:$0x3f]
        %vm201 = vcmask 130048
        %v203 = vsel %vm201, %v192, 0
        %v206 = vsel %vm201, %v193, 0
        %v209 = vsel %vm201, %v194, 0
        %v212 = vsel %vm201, %v195, 0
        %v215 = vsel %vm201, %v196, 0
        %v218 = vsel %vm201, %v197, 0
        %220 = vmatprep.subr.mxu0 0.0
        %221 = vmatpush1.msra.mxu0 %v198
        %222 = vmatprep.subr.mxu0 0.0
        %223 = vmatpush1.msra.mxu0 %v199
        %224 = vmatprep.subr.mxu0 0.0
        %225 = vmatpush1.msra.mxu0 0.0
        %226 = vmatprep.subr.mxu0 0.0
        %227 = vmatpush1.msra.mxu0 0.0
        %228 = vmatprep.subr.mxu0 0.0
        %229 = vmatpush1.msra.mxu0 0.0
        %230 = vmatprep.subr.mxu0 0.0
        %231 = vmatpush1.msra.mxu0 0.0
        %232 = vmatprep.subr.mxu0 0.0
        %233 = vmatpush1.msra.mxu0 0.0
        %234 = vmatprep.subr.mxu0 0.0
        %235 = vmatpush1.msra.mxu0 0.0
        %236 = vmatprep.subr.mxu0 0.0
        %237 = vmatpush1.msra.mxu0 0.0
        %238 = vmatprep.subr.mxu0 0.0
        %239 = vmatpush1.msra.mxu0 0.0
        %240 = vmatprep.subr.mxu0 0.0
        %241 = vmatpush1.msra.mxu0 0.0
        %242 = vmatprep.subr.mxu0 0.0
        %243 = vmatpush1.msra.mxu0 0.0
        %244 = vmatprep.subr.mxu0 0.0
        %245 = vmatpush1.msra.mxu0 0.0
        %246 = vmatprep.subr.mxu0 0.0
        %247 = vmatpush1.msra.mxu0 0.0
        %248 = vmatprep.subr.mxu0 0.0
        %249 = vmatpush1.msra.mxu0 0.0
        %250 = vmatprep.subr.mxu0 0.0
        %251 = vmatpush1.msra.mxu0 0.0
        %252 = vmatprep.subr.mxu0 0.0
        %253 = vmatpush1.msra.mxu0 0.0
        %254 = vmatprep.subr.mxu0 0.0
        %255 = vmatpush1.msra.mxu0 0.0
        %256 = vmatprep.subr.mxu0 0.0
        %257 = vmatpush1.msra.mxu0 0.0
        %258 = vmatprep.subr.mxu0 0.0
        %259 = vmatpush1.msra.mxu0 0.0
        %260 = vmatprep.subr.mxu0 0.0
        %261 = vmatpush1.msra.mxu0 0.0
        %262 = vmatprep.subr.mxu0 0.0
        %263 = vmatpush1.msra.mxu0 0.0
        %264 = vmatprep.subr.mxu0 0.0
        %265 = vmatpush1.msra.mxu0 0.0
        %266 = vmatprep.subr.mxu0 0.0
        %267 = vmatpush1.msra.mxu0 0.0
        %268 = vmatprep.subr.mxu0 0.0
        %269 = vmatpush1.msra.mxu0 0.0
        %270 = vmatprep.subr.mxu0 0.0
        %271 = vmatpush1.msra.mxu0 0.0
        %272 = vmatprep.subr.mxu0 0.0
        %273 = vmatpush1.msra.mxu0 0.0
        %274 = vmatprep.subr.mxu0 0.0
        %275 = vmatpush1.msra.mxu0 0.0
        %276 = vmatprep.subr.mxu0 0.0
        %277 = vmatpush1.msra.mxu0 0.0
        %278 = vmatprep.subr.mxu0 0.0
        %279 = vmatpush1.msra.mxu0 0.0
        %280 = vmatprep.subr.mxu0 0.0
        %281 = vmatpush1.msra.mxu0 0.0
        %282 = vmatprep.subr.mxu0 0.0
        %283 = vmatpush1.msra.mxu0 0.0
        %284 = vmatprep.mubr.f32.mxu0 0.0
        %285 = vmatmul.mubr.f32.gmra.mrb[0].mxu0 %v203
        %v286 = vpop.f32.mrb[0].mxu0
        %v287 = vadd.f32 0.0, %v286
        %v288 = vpop.f32.mrb[0].mxu0
        %289 = vmatprep.mubr.f32.mxu0 0.0
        %290 = vmatmul.mubr.f32.gmra.mrb[0].mxu0 %v206
        %v291 = vpop.f32.mrb[0].mxu0
        %v292 = vadd.f32 0.0, %v291
        %v293 = vpop.f32.mrb[0].mxu0
        %294 = vmatprep.mubr.f32.mxu0 0.0
        %295 = vmatmul.mubr.f32.gmra.mrb[0].mxu0 %v209
        %v296 = vpop.f32.mrb[0].mxu0
        %v297 = vadd.f32 0.0, %v296
        %v298 = vpop.f32.mrb[0].mxu0
        %299 = vmatprep.mubr.f32.mxu0 0.0
        %300 = vmatmul.mubr.f32.gmra.mrb[0].mxu0 %v212
        %v301 = vpop.f32.mrb[0].mxu0
        %v302 = vadd.f32 0.0, %v301
        %v303 = vpop.f32.mrb[0].mxu0
        %304 = vmatprep.mubr.f32.mxu0 0.0
        %305 = vmatmul.mubr.f32.gmra.mrb[0].mxu0 %v215
        %v306 = vpop.f32.mrb[0].mxu0
        %v307 = vadd.f32 0.0, %v306
        %v308 = vpop.f32.mrb[0].mxu0
        %309 = vmatprep.mubr.f32.mxu0 0.0
        %310 = vmatmul.mubr.f32.gmra.mrb[0].mxu0 %v218
        %v311 = vpop.f32.mrb[0].mxu0
        %v312 = vadd.f32 0.0, %v311
        %v313 = vpop.f32.mrb[0].mxu0
        %314 = vdwg.mxu0
        %v316 = vsel %vm201, %v200, 0
        %318 = vmatprep.subr.mxu0 0.0
        %319 = vmatpush1.msra.mxu0 %v287
        %320 = vmatprep.subr.mxu0 0.0
        %321 = vmatpush1.msra.mxu0 %v292
        %322 = vmatprep.subr.mxu0 0.0
        %323 = vmatpush1.msra.mxu0 0.0
        %324 = vmatprep.subr.mxu0 0.0
        %325 = vmatpush1.msra.mxu0 0.0
        %326 = vmatprep.subr.mxu0 0.0
        %327 = vmatpush1.msra.mxu0 0.0
        %328 = vmatprep.subr.mxu0 0.0
        %329 = vmatpush1.msra.mxu0 0.0
        %330 = vmatprep.subr.mxu0 0.0
        %331 = vmatpush1.msra.mxu0 0.0
        %332 = vmatprep.subr.mxu0 0.0
        %333 = vmatpush1.msra.mxu0 0.0
        %334 = vmatprep.subr.mxu0 0.0
        %335 = vmatpush1.msra.mxu0 0.0
        %336 = vmatprep.subr.mxu0 0.0
        %337 = vmatpush1.msra.mxu0 0.0
        %338 = vmatprep.subr.mxu0 0.0
        %339 = vmatpush1.msra.mxu0 0.0
        %340 = vmatprep.subr.mxu0 0.0
        %341 = vmatpush1.msra.mxu0 0.0
        %342 = vmatprep.subr.mxu0 0.0
        %343 = vmatpush1.msra.mxu0 0.0
        %344 = vmatprep.subr.mxu0 0.0
        %345 = vmatpush1.msra.mxu0 0.0
        %346 = vmatprep.subr.mxu0 0.0
        %347 = vmatpush1.msra.mxu0 0.0
        %348 = vmatprep.subr.mxu0 0.0
        %349 = vmatpush1.msra.mxu0 0.0
        %350 = vmatprep.subr.mxu0 0.0
        %351 = vmatpush1.msra.mxu0 0.0
        %352 = vmatprep.subr.mxu0 0.0
        %353 = vmatpush1.msra.mxu0 0.0
        %354 = vmatprep.subr.mxu0 0.0
        %355 = vmatpush1.msra.mxu0 0.0
        %356 = vmatprep.subr.mxu0 0.0
        %357 = vmatpush1.msra.mxu0 0.0
        %358 = vmatprep.subr.mxu0 0.0
        %359 = vmatpush1.msra.mxu0 0.0
        %360 = vmatprep.subr.mxu0 0.0
        %361 = vmatpush1.msra.mxu0 0.0
        %362 = vmatprep.subr.mxu0 0.0
        %363 = vmatpush1.msra.mxu0 0.0
        %364 = vmatprep.subr.mxu0 0.0
        %365 = vmatpush1.msra.mxu0 0.0
        %366 = vmatprep.subr.mxu0 0.0
        %367 = vmatpush1.msra.mxu0 0.0
        %368 = vmatprep.subr.mxu0 0.0
        %369 = vmatpush1.msra.mxu0 0.0
        %370 = vmatprep.subr.mxu0 0.0
        %371 = vmatpush1.msra.mxu0 0.0
        %372 = vmatprep.subr.mxu0 0.0
        %373 = vmatpush1.msra.mxu0 0.0
        %374 = vmatprep.subr.mxu0 0.0
        %375 = vmatpush1.msra.mxu0 0.0
        %376 = vmatprep.subr.mxu0 0.0
        %377 = vmatpush1.msra.mxu0 0.0
        %378 = vmatprep.subr.mxu0 0.0
        %379 = vmatpush1.msra.mxu0 0.0
        %380 = vmatprep.subr.mxu0 0.0
        %381 = vmatpush1.msra.mxu0 0.0
        %382 = vmatprep.mubr.f32.mxu0 0.0
        %383 = vmatmul.mubr.f32.gmra.mrb[0].mxu0 %v316
        %v384 = vpop.f32.mrb[0].mxu0
        %v385 = vadd.f32 0.0, %v384
        %v386 = vpop.f32.mrb[0].mxu0
        %387 = vdwg.mxu0
        %388 = vmatprep.subr.mxu0 0.0
        %389 = vmatpush1.msra.mxu0 %v297
        %390 = vmatprep.subr.mxu0 0.0
        %391 = vmatpush1.msra.mxu0 %v302
        %392 = vmatprep.subr.mxu0 0.0
        %393 = vmatpush1.msra.mxu0 0.0
        %394 = vmatprep.subr.mxu0 0.0
        %395 = vmatpush1.msra.mxu0 0.0
        %396 = vmatprep.subr.mxu0 0.0
        %397 = vmatpush1.msra.mxu0 0.0
        %398 = vmatprep.subr.mxu0 0.0
        %399 = vmatpush1.msra.mxu0 0.0
        %400 = vmatprep.subr.mxu0 0.0
        %401 = vmatpush1.msra.mxu0 0.0
        %402 = vmatprep.subr.mxu0 0.0
        %403 = vmatpush1.msra.mxu0 0.0
        %404 = vmatprep.subr.mxu0 0.0
        %405 = vmatpush1.msra.mxu0 0.0
        %406 = vmatprep.subr.mxu0 0.0
        %407 = vmatpush1.msra.mxu0 0.0
        %408 = vmatprep.subr.mxu0 0.0
        %409 = vmatpush1.msra.mxu0 0.0
        %410 = vmatprep.subr.mxu0 0.0
        %411 = vmatpush1.msra.mxu0 0.0
        %412 = vmatprep.subr.mxu0 0.0
        %413 = vmatpush1.msra.mxu0 0.0
        %414 = vmatprep.subr.mxu0 0.0
        %415 = vmatpush1.msra.mxu0 0.0
        %416 = vmatprep.subr.mxu0 0.0
        %417 = vmatpush1.msra.mxu0 0.0
        %418 = vmatprep.subr.mxu0 0.0
        %419 = vmatpush1.msra.mxu0 0.0
        %420 = vmatprep.subr.mxu0 0.0
        %421 = vmatpush1.msra.mxu0 0.0
        %422 = vmatprep.subr.mxu0 0.0
        %423 = vmatpush1.msra.mxu0 0.0
        %424 = vmatprep.subr.mxu0 0.0
        %425 = vmatpush1.msra.mxu0 0.0
        %426 = vmatprep.subr.mxu0 0.0
        %427 = vmatpush1.msra.mxu0 0.0
        %428 = vmatprep.subr.mxu0 0.0
        %429 = vmatpush1.msra.mxu0 0.0
        %430 = vmatprep.subr.mxu0 0.0
        %431 = vmatpush1.msra.mxu0 0.0
        %432 = vmatprep.subr.mxu0 0.0
        %433 = vmatpush1.msra.mxu0 0.0
        %434 = vmatprep.subr.mxu0 0.0
        %435 = vmatpush1.msra.mxu0 0.0
        %436 = vmatprep.subr.mxu0 0.0
        %437 = vmatpush1.msra.mxu0 0.0
        %438 = vmatprep.subr.mxu0 0.0
        %439 = vmatpush1.msra.mxu0 0.0
        %440 = vmatprep.subr.mxu0 0.0
        %441 = vmatpush1.msra.mxu0 0.0
        %442 = vmatprep.subr.mxu0 0.0
        %443 = vmatpush1.msra.mxu0 0.0
        %444 = vmatprep.subr.mxu0 0.0
        %445 = vmatpush1.msra.mxu0 0.0
        %446 = vmatprep.subr.mxu0 0.0
        %447 = vmatpush1.msra.mxu0 0.0
        %448 = vmatprep.subr.mxu0 0.0
        %449 = vmatpush1.msra.mxu0 0.0
        %450 = vmatprep.subr.mxu0 0.0
        %451 = vmatpush1.msra.mxu0 0.0
        %452 = vmatprep.mubr.f32.mxu0 0.0
        %453 = vmatmul.mubr.f32.gmra.mrb[0].mxu0 %v316
        %v454 = vpop.f32.mrb[0].mxu0
        %v455 = vadd.f32 0.0, %v454
        %v456 = vpop.f32.mrb[0].mxu0
        %457 = vdwg.mxu0
        %458 = vmatprep.subr.mxu0 0.0
        %459 = vmatpush1.msra.mxu0 %v307
        %460 = vmatprep.subr.mxu0 0.0
        %461 = vmatpush1.msra.mxu0 %v312
        %462 = vmatprep.subr.mxu0 0.0
        %463 = vmatpush1.msra.mxu0 0.0
        %464 = vmatprep.subr.mxu0 0.0
        %465 = vmatpush1.msra.mxu0 0.0
        %466 = vmatprep.subr.mxu0 0.0
        %467 = vmatpush1.msra.mxu0 0.0
        %468 = vmatprep.subr.mxu0 0.0
        %469 = vmatpush1.msra.mxu0 0.0
        %470 = vmatprep.subr.mxu0 0.0
        %471 = vmatpush1.msra.mxu0 0.0
        %472 = vmatprep.subr.mxu0 0.0
        %473 = vmatpush1.msra.mxu0 0.0
        %474 = vmatprep.subr.mxu0 0.0
        %475 = vmatpush1.msra.mxu0 0.0
        %476 = vmatprep.subr.mxu0 0.0
        %477 = vmatpush1.msra.mxu0 0.0
        %478 = vmatprep.subr.mxu0 0.0
        %479 = vmatpush1.msra.mxu0 0.0
        %480 = vmatprep.subr.mxu0 0.0
        %481 = vmatpush1.msra.mxu0 0.0
        %482 = vmatprep.subr.mxu0 0.0
        %483 = vmatpush1.msra.mxu0 0.0
        %484 = vmatprep.subr.mxu0 0.0
        %485 = vmatpush1.msra.mxu0 0.0
        %486 = vmatprep.subr.mxu0 0.0
        %487 = vmatpush1.msra.mxu0 0.0
        %488 = vmatprep.subr.mxu0 0.0
        %489 = vmatpush1.msra.mxu0 0.0
        %490 = vmatprep.subr.mxu0 0.0
        %491 = vmatpush1.msra.mxu0 0.0
        %492 = vmatprep.subr.mxu0 0.0
        %493 = vmatpush1.msra.mxu0 0.0
        %494 = vmatprep.subr.mxu0 0.0
        %495 = vmatpush1.msra.mxu0 0.0
        %496 = vmatprep.subr.mxu0 0.0
        %497 = vmatpush1.msra.mxu0 0.0
        %498 = vmatprep.subr.mxu0 0.0
        %499 = vmatpush1.msra.mxu0 0.0
        %500 = vmatprep.subr.mxu0 0.0
        %501 = vmatpush1.msra.mxu0 0.0
        %502 = vmatprep.subr.mxu0 0.0
        %503 = vmatpush1.msra.mxu0 0.0
        %504 = vmatprep.subr.mxu0 0.0
        %505 = vmatpush1.msra.mxu0 0.0
        %506 = vmatprep.subr.mxu0 0.0
        %507 = vmatpush1.msra.mxu0 0.0
        %508 = vmatprep.subr.mxu0 0.0
        %509 = vmatpush1.msra.mxu0 0.0
        %510 = vmatprep.subr.mxu0 0.0
        %511 = vmatpush1.msra.mxu0 0.0
        %512 = vmatprep.subr.mxu0 0.0
        %513 = vmatpush1.msra.mxu0 0.0
        %514 = vmatprep.subr.mxu0 0.0
        %515 = vmatpush1.msra.mxu0 0.0
        %516 = vmatprep.subr.mxu0 0.0
        %517 = vmatpush1.msra.mxu0 0.0
        %518 = vmatprep.subr.mxu0 0.0
        %519 = vmatpush1.msra.mxu0 0.0
        %520 = vmatprep.subr.mxu0 0.0
        %521 = vmatpush1.msra.mxu0 0.0
        %522 = vmatprep.mubr.f32.mxu0 0.0
        %523 = vmatmul.mubr.f32.gmra.mrb[0].mxu0 %v316
        %v524 = vpop.f32.mrb[0].mxu0
        %v525 = vadd.f32 0.0, %v524
        %v526 = vpop.f32.mrb[0].mxu0
        %527 = vdwg.mxu0
        %vm528 = vcmask 46080
        %529 = vst.msk [vmem:[%s189] sm:$0x3f] %vm528, %v385
        %530 = vst.msk [vmem:[%s189 + $0x8] sm:$0x3f] %vm528, %v455
        %531 = vst.msk [vmem:[%s189 + $0x10] sm:$0x3f] %vm528, %v525
        %s532 = sand.u32 %s96, 1
        %s533 = scalar_lea.sflag [#allocation4], %s532
        %s534 = sand.u32 %s96, 1
        %s535 = smul.addr %s534, 24
        %s536 = scalar_lea.vmem [#allocation5], %s535
        // Predicated region
        $region37: #{tpu_custom_call.1} parent=31 // pred_check
          %p537 = pneg %p106
        $region38: #{tpu_custom_call.1} parent=31 // pred_check_branch
          %539 = sbr.rel (%p537) target = $region40
        $region39: #{tpu_custom_call.1} parent=31 // pred_region
          %s540 = smul.u32 3, %s20
          %s542 = ssub.s32 384, 384
          %543 = vsyncadd %s533, %s542
          %s544 = smul.addr %s540, 128
          %s545 = scalar_lea.hbm %s3, %s544
          %s546 = sshll.u32 %s536, 4
          %s547 = int_to_ptr.vmem [resolvable:$true] %s546
          %552 = dma.vmem_to_hbm [thread:$0]  %s547, 384, %s545, %s533, 128, 128, 8
        $region40: #{tpu_custom_call.1} parent=31 // pred_fallthru
          _
      $region32: #{tpu_custom_call.1} parent=5 // pred_fallthru
        _
      %p553 = scmp.le.s32.totalorder 2, %s15
      // Predicated region
      $region41: #{tpu_custom_call.1} parent=5 // pred_check
        %p554 = pneg %p553
      $region42: #{tpu_custom_call.1} parent=5 // pred_check_branch
        %556 = sbr.rel (%p554) target = $region44
      $region43: #{tpu_custom_call.1} parent=5 // pred_region
        %s557 = ssub.s32 %s15, 2
        // Predicated region
        $region45: #{tpu_custom_call.1} parent=43 // pred_check
          %p558 = pneg %p112
        $region46: #{tpu_custom_call.1} parent=43 // pred_check_branch
          %560 = sbr.rel (%p558) target = $region48
        $region47: #{tpu_custom_call.1} parent=43 // pred_region
          %s561 = sand.u32 %s97, 1
          %s562 = scalar_lea.sflag [#allocation4], %s561
          %s563 = sand.u32 %s97, 1
          %s564 = smul.addr %s563, 24
          %s565 = scalar_lea.vmem [#allocation5], %s564
          %566 = dma.done %s562, 384
        $region48: #{tpu_custom_call.1} parent=43 // pred_fallthru
          _
      $region44: #{tpu_custom_call.1} parent=5 // pred_fallthru
        _
    $region6: #{tpu_custom_call.1} parent=1 // loop_footer
      %s19 = sadd.s32 1, %s15
    $region7: #{tpu_custom_call.1} parent=1 // loop_footer_branch
      %14 = sbr.rel target = $region3
    $region8: #{tpu_custom_call.1} parent=1 // loop_exit
      _
    %567 = vsyncpa [#allocation3], 1
    %s568 = scalar_lea.sflag [#allocation3], 1
    %569 = vsyncpa %s568, 1
    %570 = vsyncpa [#allocation4], 1
    %s571 = scalar_lea.sflag [#allocation4], 1
    %572 = vsyncpa %s571, 1

</llo_original>
